<compile_context>
chip_gen: v6e
topology: v6e:2x2x1
jax: 0.10.0
libtpu: 0.0.40
codegen_flags: <defaults>
</compile_context>

<pallas_src>
import jax
import jax.numpy as jnp
from jax.experimental import pallas as pl
from jax.experimental.pallas import tpu as pltpu

F_PAD = 128   # every feature dim padded to one full lane width
TILE = 128    # dst / src node tile (128-aligned for the MXU on v5e..v7x)


def _graph_conv_kernel(a_ref, hsrc_ref, hdst_ref, wr_ref, wn_ref, b_ref,
                       hout_ref, agg_ref):
    """One GraphConv layer: hout = relu(h_dst @ Wr + (A @ h) @ Wn + b)."""
    k = pl.program_id(1)

    @pl.when(k == 0)
    def _():
        agg_ref[...] = jnp.zeros_like(agg_ref)

    # Neighbor aggregation on the MXU: bf16 inputs, f32 accumulation.
    agg_ref[...] += jnp.dot(a_ref[...], hsrc_ref[...].astype(jnp.bfloat16),
                            preferred_element_type=jnp.float32)

    @pl.when(k == pl.num_programs(1) - 1)
    def _():
        h = (jnp.dot(hdst_ref[...], wr_ref[...],
                     preferred_element_type=jnp.float32)
             + jnp.dot(agg_ref[...], wn_ref[...],
                       preferred_element_type=jnp.float32)
             + b_ref[...])
        hout_ref[...] = jnp.maximum(h, 0.0)


def _graph_conv_pool_kernel(a_ref, hsrc_ref, hdst_ref, p_ref, wr_ref, wn_ref,
                            b_ref, out_ref, agg_ref):
    """Last GraphConv layer; scatter_mean fused as per-dst-tile partial sums."""
    k = pl.program_id(1)

    @pl.when(k == 0)
    def _():
        agg_ref[...] = jnp.zeros_like(agg_ref)

    agg_ref[...] += jnp.dot(a_ref[...], hsrc_ref[...].astype(jnp.bfloat16),
                            preferred_element_type=jnp.float32)

    @pl.when(k == pl.num_programs(1) - 1)
    def _():
        h3 = jnp.maximum(
            jnp.dot(hdst_ref[...], wr_ref[...],
                    preferred_element_type=jnp.float32)
            + jnp.dot(agg_ref[...], wn_ref[...],
                      preferred_element_type=jnp.float32)
            + b_ref[...],
            0.0)
        # Partial scatter_mean for this dst tile: out_i = P[:, tile_i] @ h3_i
        out_ref[...] = jnp.dot(p_ref[...], h3,
                               preferred_element_type=jnp.float32)


def _graph_conv_layer(adj_bf16, h, wr, wn, b, *, tm=TILE, tk=TILE):
    n_pad = adj_bf16.shape[0]
    grid = (n_pad // tm, n_pad // tk)
    return pl.pallas_call(
        _graph_conv_kernel,
        out_shape=jax.ShapeDtypeStruct((n_pad, F_PAD), jnp.float32),
        grid_spec=pltpu.PrefetchScalarGridSpec(
            num_scalar_prefetch=0,
            grid=grid,
            in_specs=[
                pl.BlockSpec((tm, tk), lambda i, k: (i, k)),            # A[dst, src] tile
                pl.BlockSpec((tk, F_PAD), lambda i, k: (k, 0)),         # h source rows
                pl.BlockSpec((tm, F_PAD), lambda i, k: (i, 0)),         # h dst rows (root)
                pl.BlockSpec((F_PAD, F_PAD), lambda i, k: (0, 0)),      # W_root
                pl.BlockSpec((F_PAD, F_PAD), lambda i, k: (0, 0)),      # W_nbr
                pl.BlockSpec((1, F_PAD), lambda i, k: (0, 0)),          # bias
            ],
            out_specs=pl.BlockSpec((tm, F_PAD), lambda i, k: (i, 0)),
            scratch_shapes=[pltpu.VMEM((tm, F_PAD), jnp.float32)],
        ),
        compiler_params=pltpu.CompilerParams(
            dimension_semantics=("parallel", "arbitrary"),
        ),
    )(adj_bf16, h, h, wr, wn, b)


def _graph_conv_pool_layer(adj_bf16, h, pool, wr, wn, b, *, tm=TILE, tk=TILE):
    n_pad = adj_bf16.shape[0]
    nb_pad = pool.shape[0]
    n_tiles = n_pad // tm
    grid = (n_tiles, n_pad // tk)
    partial = pl.pallas_call(
        _graph_conv_pool_kernel,
        out_shape=jax.ShapeDtypeStruct((n_tiles, nb_pad, F_PAD), jnp.float32),
        grid_spec=pltpu.PrefetchScalarGridSpec(
            num_scalar_prefetch=0,
            grid=grid,
            in_specs=[
                pl.BlockSpec((tm, tk), lambda i, k: (i, k)),
                pl.BlockSpec((tk, F_PAD), lambda i, k: (k, 0)),
                pl.BlockSpec((tm, F_PAD), lambda i, k: (i, 0)),
                pl.BlockSpec((nb_pad, tm), lambda i, k: (0, i)),        # P[:, dst tile]
                pl.BlockSpec((F_PAD, F_PAD), lambda i, k: (0, 0)),
                pl.BlockSpec((F_PAD, F_PAD), lambda i, k: (0, 0)),
                pl.BlockSpec((1, F_PAD), lambda i, k: (0, 0)),
            ],
            out_specs=pl.BlockSpec((None, nb_pad, F_PAD),
                                   lambda i, k: (i, 0, 0)),
            scratch_shapes=[pltpu.VMEM((tm, F_PAD), jnp.float32)],
        ),
        compiler_params=pltpu.CompilerParams(
            # per-dst-tile partial pooled sums -> dst axis stays parallel
            dimension_semantics=("parallel", "arbitrary"),
        ),
    )(adj_bf16, h, h, pool, wr, wn, b)
    # Tiny (n_tiles, 8, 128) reduction over dst tiles done by XLA.
    return jnp.sum(partial, axis=0)


def _pad_params(wr, wn, b):
    """Zero-pad W_root / W_nbr / bias to the 128-lane padded feature dims."""
    fin, fout = wr.shape
    wr_p = jnp.zeros((F_PAD, F_PAD), jnp.float32).at[:fin, :fout].set(wr)
    wn_p = jnp.zeros((F_PAD, F_PAD), jnp.float32).at[:fin, :fout].set(wn)
    b_p = jnp.zeros((1, F_PAD), jnp.float32).at[:, :fout].set(
        jnp.reshape(b, (1, -1)))
    return wr_p, wn_p, b_p


def triple_gcn(x, adj, pool, params, *, tile=TILE):
    """Forward pass of TripleGCN (eval mode) via Pallas TPU kernels."""
    n, in_feats = x.shape
    out_feats = params[-1][0].shape[1]
    nb = pool.shape[0]
    n_pad = ((n + tile - 1) // tile) * tile
    nb_pad = ((nb + 7) // 8) * 8   # full sublane tile for the pooled output

    # Padded, bf16 adjacency (zero rows/cols for padding nodes are inert).
    adj_p = (jnp.zeros((n_pad, n_pad), jnp.float32)
             .at[:n, :n].set(adj)
             .astype(jnp.bfloat16))
    pool_p = jnp.zeros((nb_pad, n_pad), jnp.float32).at[:nb, :n].set(pool)
    h = jnp.zeros((n_pad, F_PAD), jnp.float32).at[:n, :in_feats].set(x)

    (wr1, wn1, b1), (wr2, wn2, b2), (wr3, wn3, b3) = [
        _pad_params(*p) for p in params]

    h = _graph_conv_layer(adj_p, h, wr1, wn1, b1, tm=tile, tk=tile)  # conv1 + ReLU
    # F.dropout(p=0.5) is identity in eval mode
    h = _graph_conv_layer(adj_p, h, wr2, wn2, b2, tm=tile, tk=tile)  # conv2 + ReLU
    # F.dropout(p=0.6) is identity in eval mode
    out = _graph_conv_pool_layer(adj_p, h, pool_p, wr3, wn3, b3,
                                 tm=tile, tk=tile)                   # conv3 + ReLU + pool
    return out[:nb, :out_feats]


def triple_gcn_ref(x, adj, pool, params):
    h = x
    for wr, wn, b in params:
        h = jnp.maximum(h @ wr + (adj @ h) @ wn + b, 0.0)
    return pool @ h


if __name__ == "__main__":
    key = jax.random.PRNGKey(0)

    # Small synthetic batch: 200 nodes split into 2 graphs of 100 nodes each.
    N = 200
    B = 2
    in_feats = 8
    hid_feats = 16          # conv1 outputs hid_feats * 2 = 32
    out_feats = 8
    num_edges = 600
    npg = N // B

    keys = jax.random.split(key, 12)
    k_x, k_src, k_dst = keys[0], keys[1], keys[2]
    k_w = keys[3:9]
    k_b = keys[9:12]

    x = jax.random.normal(k_x, (N, in_feats), dtype=jnp.float32)

    # Deterministic random edge_index (src -> dst), kept inside each graph.
    src = jax.random.randint(k_src, (num_edges,), 0, npg)
    dst = jax.random.randint(k_dst, (num_edges,), 0, npg)
    g = jnp.arange(num_edges) % B
    src = src + g * npg
    dst = dst + g * npg

    # Dense adjacency A[dst, src] (multiplicities counted, as in sum-aggr).
    adj = jnp.zeros((N, N), jnp.float32).at[dst, src].add(1.0)

    # Batch assignment and scatter_mean pooling matrix P[b, n] = 1/count_b.
    batch = jnp.repeat(jnp.arange(B), npg)
    one_hot = (batch[None, :] == jnp.arange(B)[:, None]).astype(jnp.float32)
    pool = one_hot / one_hot.sum(axis=1, keepdims=True)

    def glorot(k, shape):
        fan_in, fan_out = shape
        lim = (6.0 / (fan_in + fan_out)) ** 0.5
        return jax.random.uniform(k, shape, jnp.float32, -lim, lim)

    dims = [(in_feats, hid_feats * 2), (hid_feats * 2, hid_feats),
            (hid_feats, out_feats)]
    params = []
    for i, (di, do) in enumerate(dims):
        wr = glorot(k_w[2 * i], (di, do))        # W_root
        wn = glorot(k_w[2 * i + 1], (di, do))    # W_neighbor
        b = jax.random.uniform(k_b[i], (1, do), jnp.float32, -0.1, 0.1)
        params.append((wr, wn, b))

    out = jax.block_until_ready(triple_gcn(x, adj, pool, params))
    ref = triple_gcn_ref(x, adj, pool, params)

    assert out.shape == (B, out_feats)
    # bf16 is used only for the adjacency stream (exact) and the activations
    # fed to the aggregation MXU; accumulation is f32 -> small tolerance.
    assert jnp.allclose(out, ref, atol=3e-2, rtol=3e-2), (
        f"mismatch vs JAX reference, max abs diff {jnp.max(jnp.abs(out - ref))}")

    print("KERNEL_OK")
</pallas_src>

<mosaic_0001>
module attributes {stable_mosaic.version = 11 : i64} {
  func.func @_graph_conv_kernel(%arg0: i32, %arg1: i32, %arg2: memref<128x128xbf16, #tpu.memory_space<vmem>>, %arg3: memref<128x128xf32, #tpu.memory_space<vmem>>, %arg4: memref<128x128xf32, #tpu.memory_space<vmem>>, %arg5: memref<128x128xf32, #tpu.memory_space<vmem>>, %arg6: memref<128x128xf32, #tpu.memory_space<vmem>>, %arg7: memref<1x128xf32, #tpu.memory_space<vmem>>, %arg8: memref<128x128xf32, #tpu.memory_space<vmem>>, %arg9: memref<128x128xf32, #tpu.memory_space<vmem>>) attributes {dimension_semantics = [#tpu.dimension_semantics<parallel>, #tpu.dimension_semantics<arbitrary>], iteration_bounds = array<i64: 2, 2>, scalar_prefetch = 0 : i64, scratch_operands = 1 : i64, tpu.core_type = #tpu.core_type<tc>, window_params = [{transform_indices = @transform_0, window_bounds = array<i64: 128, 128>}, {transform_indices = @transform_1, window_bounds = array<i64: 128, 128>}, {transform_indices = @transform_2, window_bounds = array<i64: 128, 128>}, {pipeline_mode = #tpu.pipeline_mode<synchronous>, transform_indices = @transform_3, window_bounds = array<i64: 128, 128>}, {pipeline_mode = #tpu.pipeline_mode<synchronous>, transform_indices = @transform_4, window_bounds = array<i64: 128, 128>}, {pipeline_mode = #tpu.pipeline_mode<synchronous>, transform_indices = @transform_5, window_bounds = array<i64: 1, 128>}, {transform_indices = @transform_6, window_bounds = array<i64: 128, 128>}]} {
    %c0_i32 = arith.constant 0 : i32
    %0 = arith.cmpi eq, %arg1, %c0_i32 : i32
    %1 = arith.extui %0 : i1 to i32
    %c0_i32_0 = arith.constant 0 : i32
    %2 = arith.cmpi ne, %1, %c0_i32_0 : i32
    scf.if %2 {
      %cst_9 = arith.constant 0.000000e+00 : f32
      %13 = vector.broadcast %cst_9 : f32 to vector<128x128xf32>
      %c0_10 = arith.constant 0 : index
      %c0_11 = arith.constant 0 : index
      %14 = vector.load %arg9[%c0_10, %c0_11] : memref<128x128xf32, #tpu.memory_space<vmem>>, vector<128x128xf32>
      tpu.vector_store %arg9[%c0_10, %c0_11], %13 {strides = array<i32>} : memref<128x128xf32, #tpu.memory_space<vmem>>, vector<128x128xf32>,
    } else {
    }
    %c0 = arith.constant 0 : index
    %c0_1 = arith.constant 0 : index
    %3 = vector.load %arg9[%c0, %c0_1] : memref<128x128xf32, #tpu.memory_space<vmem>>, vector<128x128xf32>
    %c0_2 = arith.constant 0 : index
    %c0_3 = arith.constant 0 : index
    %4 = vector.load %arg2[%c0_2, %c0_3] : memref<128x128xbf16, #tpu.memory_space<vmem>>, vector<128x128xbf16>
    %c0_4 = arith.constant 0 : index
    %c0_5 = arith.constant 0 : index
    %5 = vector.load %arg3[%c0_4, %c0_5] : memref<128x128xf32, #tpu.memory_space<vmem>>, vector<128x128xf32>
    %6 = arith.truncf %5 : vector<128x128xf32> to vector<128x128xbf16>
    %cst = arith.constant dense<0.000000e+00> : vector<128x128xf32>
    %7 = tpu.matmul %4, %6, %cst {dimension_numbers = #tpu.dot_dimension_numbers<[1], [0], [0], [1], [0, 0, 1, 1], [], []>} : vector<128x128xbf16>, vector<128x128xbf16>, vector<128x128xf32> -> vector<128x128xf32>
    %8 = arith.addf %3, %7 : vector<128x128xf32>
    %c0_6 = arith.constant 0 : index
    %c0_7 = arith.constant 0 : index
    %9 = vector.load %arg9[%c0_6, %c0_7] : memref<128x128xf32, #tpu.memory_space<vmem>>, vector<128x128xf32>
    tpu.vector_store %arg9[%c0_6, %c0_7], %8 {strides = array<i32>} : memref<128x128xf32, #tpu.memory_space<vmem>>, vector<128x128xf32>,
    %c1_i32 = arith.constant 1 : i32
    %10 = arith.cmpi eq, %arg1, %c1_i32 : i32
    %11 = arith.extui %10 : i1 to i32
    %c0_i32_8 = arith.constant 0 : i32
    %12 = arith.cmpi ne, %11, %c0_i32_8 : i32
    scf.if %12 {
      %c0_9 = arith.constant 0 : index
      %c0_10 = arith.constant 0 : index
      %13 = vector.load %arg4[%c0_9, %c0_10] : memref<128x128xf32, #tpu.memory_space<vmem>>, vector<128x128xf32>
      %c0_11 = arith.constant 0 : index
      %c0_12 = arith.constant 0 : index
      %14 = vector.load %arg5[%c0_11, %c0_12] : memref<128x128xf32, #tpu.memory_space<vmem>>, vector<128x128xf32>
      %cst_13 = arith.constant dense<0.000000e+00> : vector<128x128xf32>
      %15 = tpu.matmul %13, %14, %cst_13 {dimension_numbers = #tpu.dot_dimension_numbers<[1], [0], [0], [1], [0, 0, 1, 1], [], []>} : vector<128x128xf32>, vector<128x128xf32>, vector<128x128xf32> -> vector<128x128xf32>
      %c0_14 = arith.constant 0 : index
      %c0_15 = arith.constant 0 : index
      %16 = vector.load %arg9[%c0_14, %c0_15] : memref<128x128xf32, #tpu.memory_space<vmem>>, vector<128x128xf32>
      %c0_16 = arith.constant 0 : index
      %c0_17 = arith.constant 0 : index
      %17 = vector.load %arg6[%c0_16, %c0_17] : memref<128x128xf32, #tpu.memory_space<vmem>>, vector<128x128xf32>
      %cst_18 = arith.constant dense<0.000000e+00> : vector<128x128xf32>
      %18 = tpu.matmul %16, %17, %cst_18 {dimension_numbers = #tpu.dot_dimension_numbers<[1], [0], [0], [1], [0, 0, 1, 1], [], []>} : vector<128x128xf32>, vector<128x128xf32>, vector<128x128xf32> -> vector<128x128xf32>
      %19 = arith.addf %15, %18 : vector<128x128xf32>
      %c0_19 = arith.constant 0 : index
      %c0_20 = arith.constant 0 : index
      %20 = vector.load %arg7[%c0_19, %c0_20] : memref<1x128xf32, #tpu.memory_space<vmem>>, vector<1x128xf32>
      %21 = vector.broadcast %20 : vector<1x128xf32> to vector<128x128xf32>
      %22 = arith.addf %19, %21 : vector<128x128xf32>
      %cst_21 = arith.constant 0.000000e+00 : f32
      %23 = vector.broadcast %cst_21 : f32 to vector<128x128xf32>
      %24 = arith.maximumf %22, %23 : vector<128x128xf32>
      %c0_22 = arith.constant 0 : index
      %c0_23 = arith.constant 0 : index
      %25 = vector.load %arg8[%c0_22, %c0_23] : memref<128x128xf32, #tpu.memory_space<vmem>>, vector<128x128xf32>
      tpu.vector_store %arg8[%c0_22, %c0_23], %24 {strides = array<i32>} : memref<128x128xf32, #tpu.memory_space<vmem>>, vector<128x128xf32>,
    } else {
    }
    return
  }
  func.func @transform_0(%arg0: i32, %arg1: i32) -> (i32, i32) {
    %c0_i32 = arith.constant 0 : i32
    return %arg0, %arg1 : i32, i32
  }
  func.func @transform_1(%arg0: i32, %arg1: i32) -> (i32, i32) {
    %c0_i32 = arith.constant 0 : i32
    %c0_i32_0 = arith.constant 0 : i32
    return %arg1, %c0_i32 : i32, i32
  }
  func.func @transform_2(%arg0: i32, %arg1: i32) -> (i32, i32) {
    %c0_i32 = arith.constant 0 : i32
    %c0_i32_0 = arith.constant 0 : i32
    return %arg0, %c0_i32 : i32, i32
  }
  func.func @transform_3(%arg0: i32, %arg1: i32) -> (i32, i32) {
    %c0_i32 = arith.constant 0 : i32
    %c0_i32_0 = arith.constant 0 : i32
    %c0_i32_1 = arith.constant 0 : i32
    return %c0_i32, %c0_i32_0 : i32, i32
  }
  func.func @transform_4(%arg0: i32, %arg1: i32) -> (i32, i32) {
    %c0_i32 = arith.constant 0 : i32
    %c0_i32_0 = arith.constant 0 : i32
    %c0_i32_1 = arith.constant 0 : i32
    return %c0_i32, %c0_i32_0 : i32, i32
  }
  func.func @transform_5(%arg0: i32, %arg1: i32) -> (i32, i32) {
    %c0_i32 = arith.constant 0 : i32
    %c0_i32_0 = arith.constant 0 : i32
    %c0_i32_1 = arith.constant 0 : i32
    return %c0_i32, %c0_i32_0 : i32, i32
  }
  func.func @transform_6(%arg0: i32, %arg1: i32) -> (i32, i32) {
    %c0_i32 = arith.constant 0 : i32
    %c0_i32_0 = arith.constant 0 : i32
    return %arg0, %c0_i32 : i32, i32
  }
}

</mosaic_0001>

<llo_original>
// kernel: tpu_custom_call.1
$region0: #{tpu_custom_call.1}
  #allocation0 [shape = 'u32[]', space=smem, size = 0x4, offset = 0x4, fixed_abs, tag = 'smem constant byte address 0x4 - core index']
  #allocation1 [shape = 'u32[144,128]{1,0:T(1,128)}', space=vmem, size = 0x12000, scoped, tag = 'internal scratch']
  #allocation2 [shape = 'f32[128,128]{1,0:T(8,128)}', space=vmem, size = 0x10000, scoped, tag = 'scratch operand']
  %s0 = inlined_call_operand.hbm [shape: bf16[256,256], index: 0, kind: input, shape index: {}]
  %s1 = inlined_call_operand.hbm [shape: f32[256,128], index: 1, kind: input, shape index: {}]
  %s2 = inlined_call_operand.hbm [shape: f32[256,128], index: 2, kind: input, shape index: {}]
  %s3 = inlined_call_operand.hbm [shape: f32[128,128], index: 3, kind: input, shape index: {}]
  %s4 = inlined_call_operand.hbm [shape: f32[128,128], index: 4, kind: input, shape index: {}]
  %s5 = inlined_call_operand.vmem [shape: f32[1,128], index: 5, kind: input, shape index: {}]
  %s6 = inlined_call_operand.hbm [shape: f32[256,128], index: 6, kind: output, shape index: {}]
  %s7 = sld [smem:[#allocation0]]
  $region85: #{tpu_custom_call.1} parent=0
    _
  %s9 = ssub.s32 1, %s7
  %s10 = scalar_select 0, %s9, %s7
  $region1: #{tpu_custom_call.1} parent=0
    #allocation3 [shape = 'u8[65536]{0}', space=vmem, size = 0x10000, scoped, tag = 'input window, operand 0']
    #allocation4 [shape = 's32[2]{0}', space=sflag, size = 0x8, scoped, tag = 'scoped memory for tpu_custom_call.1']
    #allocation5 [shape = 's32[2]{0}', space=sflag, size = 0x8, scoped, tag = 'scoped memory for tpu_custom_call.1']
    #allocation6 [shape = 'u8[131072]{0}', space=vmem, size = 0x20000, scoped, tag = 'input window, operand 1']
    #allocation7 [shape = 's32[2]{0}', space=sflag, size = 0x8, scoped, tag = 'scoped memory for tpu_custom_call.1']
    #allocation8 [shape = 'u8[131072]{0}', space=vmem, size = 0x20000, scoped, tag = 'input window, operand 2']
    #allocation9 [shape = 'u8[65536]{0}', space=vmem, size = 0x10000, scoped, tag = 'input window, operand 3, single buffered']
    #allocation10 [shape = 's32[1]{0}', space=sflag, size = 0x4, scoped, tag = 'scoped memory for tpu_custom_call.1']
    #allocation11 [shape = 'u8[65536]{0}', space=vmem, size = 0x10000, scoped, tag = 'input window, operand 4, single buffered']
    #allocation12 [shape = 'u8[131072]{0}', space=vmem, size = 0x20000, scoped, tag = 'output window, operand 0']
    %11 = vsyncpa [#allocation4], 0
    %s12 = scalar_lea.sflag [#allocation4], 1
    %13 = vsyncpa %s12, 0
    %14 = vsyncpa [#allocation7], 0
    %s15 = scalar_lea.sflag [#allocation7], 1
    %16 = vsyncpa %s15, 0
    %17 = vsyncpa [#allocation10], 0
    %18 = vsyncpa [#allocation5], 0
    %s19 = scalar_lea.sflag [#allocation5], 1
    %20 = vsyncpa %s19, 0
    loop: start=0, step=1, limit=6
    $region2: #{tpu_custom_call.1} parent=1 // loop_pre_header
      _
    $region3: #{tpu_custom_call.1} parent=1 // loop_header
      %s22 = sphi 0, %s26
      %p23 = scmp.ge.s32.totalorder %s22, 6
      %s29 = sphi 0, %s41
      %s30 = sphi 0, %s37
      %s31 = sphi 0, %s29
      %s32 = sphi 0, %s30
      %s33 = sphi 0, %s31
      %s34 = sphi 0, %s32
      %s46 = sphi 0, %s48
      %s49 = sphi 0, %s46
      %s50 = sphi 0, %s49
      %s66 = sphi 0, %s50
      %s72 = sphi 0, %s74
      %s75 = sphi 0, %s72
      %s76 = sphi 0, %s75
      %s92 = sphi 0, %s76
      %s98 = sphi 0, %s100
      %s101 = sphi 0, %s98
      %s102 = sphi 0, %s101
      %s118 = sphi 0, %s102
      %s122 = sphi 0, %s122
      %s124 = sphi 0, %s122
      %s125 = sphi 0, %s124
      %s139 = sphi 0, %s125
      %s143 = sphi 0, %s143
      %s145 = sphi 0, %s143
      %s146 = sphi 0, %s145
      %s160 = sphi 0, %s146
      %s164 = sphi 0, %s164
      %s166 = sphi 0, %s164
      %s167 = sphi 0, %s166
      %s181 = sphi 0, %s167
      %s187 = sphi 0, %s189
      %s190 = sphi 0, %s187
      %s191 = sphi 0, %s190
      %s207 = sphi 0, %s191
    $region4: #{tpu_custom_call.1} parent=1 // loop_header_branch
      %25 = sbr.rel (%p23) target = $region8
    $region5: #{tpu_custom_call.1} parent=1 // loop_body
      %s27 = ssub.s32 %s22, 1
      %s28 = ssub.s32 %s22, 2
      %s35 = sadd.s32 1, %s30
      %p36 = scmp.ge.s32.totalorder %s35, 2
      %s37 = scalar_select %p36, 0, %s35
      %s38 = sadd.s32 1, %s29
      %s39 = scalar_select %p36, %s38, %s29
      %p40 = scmp.ge.s32.totalorder %s39, 2
      %s41 = scalar_select %p40, 0, %s39
      %s42 = ssub.s32 %s29, %s41
      %s43 = ssub.s32 %s30, %s37
      %s44 = sor.u32 %s42, %s43
      %p45 = scmp.eq.s32.totalorder %s44, 0
      %s47 = sadd.s32 %s46, 1
      %s48 = scalar_select %p45, %s46, %s47
      %p51 = pneg %p45
      %p52 = scmp.eq.s32.totalorder %s22, 3
      %p53 = por %p51, %p52
      %p54 = scmp.ne.s32.totalorder %s46, %s49
      %p55 = scmp.eq.s32.totalorder %s22, 0
      %p56 = por %p54, %p55
      %p57 = scmp.ne.s32.totalorder %s46, %s49
      %p58 = scmp.eq.s32.totalorder %s27, 3
      %p59 = por %p57, %p58
      %p60 = scmp.ne.s32.totalorder %s49, %s50
      %p61 = scmp.eq.s32.totalorder %s27, 0
      %p62 = por %p60, %p61
      %p63 = scmp.ne.s32.totalorder %s49, %s50
      %p64 = scmp.eq.s32.totalorder %s28, 3
      %p65 = por %p63, %p64
      %p67 = scmp.ne.s32.totalorder %s50, %s66
      %p68 = scmp.eq.s32.totalorder %s28, 0
      %p69 = por %p67, %p68
      %s70 = ssub.s32 %s30, %s37
      %p71 = scmp.eq.s32.totalorder %s70, 0
      %s73 = sadd.s32 %s72, 1
      %s74 = scalar_select %p71, %s72, %s73
      %p77 = pneg %p71
      %p78 = scmp.eq.s32.totalorder %s22, 3
      %p79 = por %p77, %p78
      %p80 = scmp.ne.s32.totalorder %s72, %s75
      %p81 = scmp.eq.s32.totalorder %s22, 0
      %p82 = por %p80, %p81
      %p83 = scmp.ne.s32.totalorder %s72, %s75
      %p84 = scmp.eq.s32.totalorder %s27, 3
      %p85 = por %p83, %p84
      %p86 = scmp.ne.s32.totalorder %s75, %s76
      %p87 = scmp.eq.s32.totalorder %s27, 0
      %p88 = por %p86, %p87
      %p89 = scmp.ne.s32.totalorder %s75, %s76
      %p90 = scmp.eq.s32.totalorder %s28, 3
      %p91 = por %p89, %p90
      %p93 = scmp.ne.s32.totalorder %s76, %s92
      %p94 = scmp.eq.s32.totalorder %s28, 0
      %p95 = por %p93, %p94
      %s96 = ssub.s32 %s29, %s41
      %p97 = scmp.eq.s32.totalorder %s96, 0
      %s99 = sadd.s32 %s98, 1
      %s100 = scalar_select %p97, %s98, %s99
      %p103 = pneg %p97
      %p104 = scmp.eq.s32.totalorder %s22, 3
      %p105 = por %p103, %p104
      %p106 = scmp.ne.s32.totalorder %s98, %s101
      %p107 = scmp.eq.s32.totalorder %s22, 0
      %p108 = por %p106, %p107
      %p109 = scmp.ne.s32.totalorder %s98, %s101
      %p110 = scmp.eq.s32.totalorder %s27, 3
      %p111 = por %p109, %p110
      %p112 = scmp.ne.s32.totalorder %s101, %s102
      %p113 = scmp.eq.s32.totalorder %s27, 0
      %p114 = por %p112, %p113
      %p115 = scmp.ne.s32.totalorder %s101, %s102
      %p116 = scmp.eq.s32.totalorder %s28, 3
      %p117 = por %p115, %p116
      %p119 = scmp.ne.s32.totalorder %s102, %s118
      %p120 = scmp.eq.s32.totalorder %s28, 0
      %p121 = por %p119, %p120
      %s123 = sadd.s32 %s122, 1
      %p126 = scmp.eq.s32.totalorder %s22, 3
      %p127 = scmp.ne.s32.totalorder %s122, %s124
      %p128 = scmp.eq.s32.totalorder %s22, 0
      %p129 = por %p127, %p128
      %p130 = scmp.ne.s32.totalorder %s122, %s124
      %p131 = scmp.eq.s32.totalorder %s27, 3
      %p132 = por %p130, %p131
      %p133 = scmp.ne.s32.totalorder %s124, %s125
      %p134 = scmp.eq.s32.totalorder %s27, 0
      %p135 = por %p133, %p134
      %p136 = scmp.ne.s32.totalorder %s124, %s125
      %p137 = scmp.eq.s32.totalorder %s28, 3
      %p138 = por %p136, %p137
      %p140 = scmp.ne.s32.totalorder %s125, %s139
      %p141 = scmp.eq.s32.totalorder %s28, 0
      %p142 = por %p140, %p141
      %s144 = sadd.s32 %s143, 1
      %p147 = scmp.eq.s32.totalorder %s22, 3
      %p148 = scmp.ne.s32.totalorder %s143, %s145
      %p149 = scmp.eq.s32.totalorder %s22, 0
      %p150 = por %p148, %p149
      %p151 = scmp.ne.s32.totalorder %s143, %s145
      %p152 = scmp.eq.s32.totalorder %s27, 3
      %p153 = por %p151, %p152
      %p154 = scmp.ne.s32.totalorder %s145, %s146
      %p155 = scmp.eq.s32.totalorder %s27, 0
      %p156 = por %p154, %p155
      %p157 = scmp.ne.s32.totalorder %s145, %s146
      %p158 = scmp.eq.s32.totalorder %s28, 3
      %p159 = por %p157, %p158
      %p161 = scmp.ne.s32.totalorder %s146, %s160
      %p162 = scmp.eq.s32.totalorder %s28, 0
      %p163 = por %p161, %p162
      %s165 = sadd.s32 %s164, 1
      %p168 = scmp.eq.s32.totalorder %s22, 3
      %p169 = scmp.ne.s32.totalorder %s164, %s166
      %p170 = scmp.eq.s32.totalorder %s22, 0
      %p171 = por %p169, %p170
      %p172 = scmp.ne.s32.totalorder %s164, %s166
      %p173 = scmp.eq.s32.totalorder %s27, 3
      %p174 = por %p172, %p173
      %p175 = scmp.ne.s32.totalorder %s166, %s167
      %p176 = scmp.eq.s32.totalorder %s27, 0
      %p177 = por %p175, %p176
      %p178 = scmp.ne.s32.totalorder %s166, %s167
      %p179 = scmp.eq.s32.totalorder %s28, 3
      %p180 = por %p178, %p179
      %p182 = scmp.ne.s32.totalorder %s167, %s181
      %p183 = scmp.eq.s32.totalorder %s28, 0
      %p184 = por %p182, %p183
      %s185 = ssub.s32 %s29, %s41
      %p186 = scmp.eq.s32.totalorder %s185, 0
      %s188 = sadd.s32 %s187, 1
      %s189 = scalar_select %p186, %s187, %s188
      %p192 = pneg %p186
      %p193 = scmp.eq.s32.totalorder %s22, 3
      %p194 = por %p192, %p193
      %p195 = scmp.ne.s32.totalorder %s187, %s190
      %p196 = scmp.eq.s32.totalorder %s22, 0
      %p197 = por %p195, %p196
      %p198 = scmp.ne.s32.totalorder %s187, %s190
      %p199 = scmp.eq.s32.totalorder %s27, 3
      %p200 = por %p198, %p199
      %p201 = scmp.ne.s32.totalorder %s190, %s191
      %p202 = scmp.eq.s32.totalorder %s27, 0
      %p203 = por %p201, %p202
      %p204 = scmp.ne.s32.totalorder %s190, %s191
      %p205 = scmp.eq.s32.totalorder %s28, 3
      %p206 = por %p204, %p205
      %p208 = scmp.ne.s32.totalorder %s191, %s207
      %p209 = scmp.eq.s32.totalorder %s28, 0
      %p210 = por %p208, %p209
      %p211 = scmp.le.s32.totalorder 1, %s22
      %p212 = scmp.lt.s32.totalorder %s22, 5
      %p213 = pnand %p211, %p212
      %p214 = pneg %p213
      // Predicated region
      $region9: #{tpu_custom_call.1} parent=5 // pred_check
        _
      $region10: #{tpu_custom_call.1} parent=5 // pred_check_branch
        %216 = sbr.rel (%p213) target = $region12
      $region11: #{tpu_custom_call.1} parent=5 // pred_region
        %s217 = ssub.s32 %s22, 1
        // Predicated region
        $region13: #{tpu_custom_call.1} parent=11 // pred_check
          %p218 = pneg %p135
        $region14: #{tpu_custom_call.1} parent=11 // pred_check_branch
          %220 = sbr.rel (%p218) target = $region16
        $region15: #{tpu_custom_call.1} parent=11 // pred_region
          %s222 = ssub.s32 2048, 2048
          %223 = vsyncadd [#allocation10], %s222
          %s224 = sshll.u32 [#allocation9], 4
          %s225 = int_to_ptr.vmem [resolvable:$true] %s224
          %230 = dma.hbm_to_vmem [thread:$0]  %s3, 2048, %s225, [#allocation10], 128, 128, 8
        $region16: #{tpu_custom_call.1} parent=11 // pred_fallthru
          _
        // Predicated region
        $region17: #{tpu_custom_call.1} parent=11 // pred_check
          %p231 = pneg %p156
        $region18: #{tpu_custom_call.1} parent=11 // pred_check_branch
          %233 = sbr.rel (%p231) target = $region20
        $region19: #{tpu_custom_call.1} parent=11 // pred_region
          %s235 = ssub.s32 2048, 2048
          %236 = vsyncadd [#allocation10], %s235
          %s237 = sshll.u32 [#allocation11], 4
          %s238 = int_to_ptr.vmem [resolvable:$true] %s237
          %243 = dma.hbm_to_vmem [thread:$0]  %s4, 2048, %s238, [#allocation10], 128, 128, 8
        $region20: #{tpu_custom_call.1} parent=11 // pred_fallthru
          _
        // Predicated region
        $region21: #{tpu_custom_call.1} parent=11 // pred_check
          %p244 = pneg %p177
        $region22: #{tpu_custom_call.1} parent=11 // pred_check_branch
          %246 = sbr.rel (%p244) target = $region24
        $region23: #{tpu_custom_call.1} parent=11 // pred_region
          _
        $region24: #{tpu_custom_call.1} parent=11 // pred_fallthru
          _
      $region12: #{tpu_custom_call.1} parent=5 // pred_fallthru
        _
      %p247 = scmp.lt.s32.totalorder %s22, 4
      // Predicated region
      $region25: #{tpu_custom_call.1} parent=5 // pred_check
        %p248 = pneg %p247
      $region26: #{tpu_custom_call.1} parent=5 // pred_check_branch
        %250 = sbr.rel (%p248) target = $region28
      $region27: #{tpu_custom_call.1} parent=5 // pred_region
        // Predicated region
        $region29: #{tpu_custom_call.1} parent=27 // pred_check
          %p251 = pneg %p56
        $region30: #{tpu_custom_call.1} parent=27 // pred_check_branch
          %253 = sbr.rel (%p251) target = $region32
        $region31: #{tpu_custom_call.1} parent=27 // pred_region
          %s254 = sand.u32 %s46, 1
          %s255 = scalar_lea.sflag [#allocation4], %s254
          %s256 = sand.u32 %s46, 1
          %s257 = smul.addr %s256, 64
          %s258 = scalar_lea.vmem [#allocation3], %s257
          %s259 = smul.u32 16, %s29
          %s261 = ssub.s32 1024, 1024
          %262 = vsyncadd %s255, %s261
          %s263 = smul.addr %s259, 2
          %s264 = sadd.s32 %s30, %s263
          %s265 = smul.addr %s264, 64
          %s266 = scalar_lea.hbm %s0, %s265
          %s267 = sshll.u32 %s258, 4
          %s268 = int_to_ptr.vmem [resolvable:$true] %s267
          %273 = dma.hbm_to_vmem [thread:$0]  %s266, 1024, %s268, %s255, 128, 64, 4
        $region32: #{tpu_custom_call.1} parent=27 // pred_fallthru
          _
        // Predicated region
        $region33: #{tpu_custom_call.1} parent=27 // pred_check
          %p274 = pneg %p82
        $region34: #{tpu_custom_call.1} parent=27 // pred_check_branch
          %276 = sbr.rel (%p274) target = $region36
        $region35: #{tpu_custom_call.1} parent=27 // pred_region
          %s277 = sand.u32 %s22, 1
          %s278 = scalar_lea.sflag [#allocation7], %s277
          %s279 = sand.u32 %s72, 1
          %s280 = smul.addr %s279, 128
          %s281 = scalar_lea.vmem [#allocation6], %s280
          %s282 = smul.u32 16, %s30
          %s284 = ssub.s32 2048, 2048
          %285 = vsyncadd %s278, %s284
          %s286 = smul.addr %s282, 128
          %s287 = scalar_lea.hbm %s1, %s286
          %s288 = sshll.u32 %s281, 4
          %s289 = int_to_ptr.vmem [resolvable:$true] %s288
          %294 = dma.hbm_to_vmem [thread:$0]  %s287, 2048, %s289, %s278, 128, 128, 8
        $region36: #{tpu_custom_call.1} parent=27 // pred_fallthru
          _
        // Predicated region
        $region37: #{tpu_custom_call.1} parent=27 // pred_check
          %p295 = pneg %p108
        $region38: #{tpu_custom_call.1} parent=27 // pred_check_branch
          %297 = sbr.rel (%p295) target = $region40
        $region39: #{tpu_custom_call.1} parent=27 // pred_region
          %s298 = sand.u32 %s22, 1
          %s299 = scalar_lea.sflag [#allocation7], %s298
          %s300 = sand.u32 %s98, 1
          %s301 = smul.addr %s300, 128
          %s302 = scalar_lea.vmem [#allocation8], %s301
          %s303 = smul.u32 16, %s29
          %s305 = ssub.s32 2048, 2048
          %306 = vsyncadd %s299, %s305
          %s307 = smul.addr %s303, 128
          %s308 = scalar_lea.hbm %s2, %s307
          %s309 = sshll.u32 %s302, 4
          %s310 = int_to_ptr.vmem [resolvable:$true] %s309
          %315 = dma.hbm_to_vmem [thread:$0]  %s308, 2048, %s310, %s299, 128, 128, 8
        $region40: #{tpu_custom_call.1} parent=27 // pred_fallthru
          _
      $region28: #{tpu_custom_call.1} parent=5 // pred_fallthru
        _
      %p316 = scmp.le.s32.totalorder 1, %s22
      %p317 = scmp.lt.s32.totalorder %s22, 5
      %p318 = pnand %p316, %p317
      %p319 = pneg %p318
      // Predicated region
      $region41: #{tpu_custom_call.1} parent=5 // pred_check
        _
      $region42: #{tpu_custom_call.1} parent=5 // pred_check_branch
        %321 = sbr.rel (%p318) target = $region44
      $region43: #{tpu_custom_call.1} parent=5 // pred_region
        %s322 = ssub.s32 %s22, 1
        %s323 = sand.u32 %s49, 1
        %s324 = scalar_lea.sflag [#allocation4], %s323
        %s325 = sand.u32 %s49, 1
        %s326 = smul.addr %s325, 64
        %s327 = scalar_lea.vmem [#allocation3], %s326
        // Predicated region
        $region45: #{tpu_custom_call.1} parent=43 // pred_check
          %p328 = pneg %p62
        $region46: #{tpu_custom_call.1} parent=43 // pred_check_branch
          %330 = sbr.rel (%p328) target = $region48
        $region47: #{tpu_custom_call.1} parent=43 // pred_region
          %331 = dma.done %s324, 1024
        $region48: #{tpu_custom_call.1} parent=43 // pred_fallthru
          _
        %s332 = sand.u32 %s27, 1
        %s333 = scalar_lea.sflag [#allocation7], %s332
        %s334 = sand.u32 %s75, 1
        %s335 = smul.addr %s334, 128
        %s336 = scalar_lea.vmem [#allocation6], %s335
        // Predicated region
        $region49: #{tpu_custom_call.1} parent=43 // pred_check
          %p337 = pneg %p88
        $region50: #{tpu_custom_call.1} parent=43 // pred_check_branch
          %339 = sbr.rel (%p337) target = $region52
        $region51: #{tpu_custom_call.1} parent=43 // pred_region
          %340 = dma.done %s333, 2048
        $region52: #{tpu_custom_call.1} parent=43 // pred_fallthru
          _
        %s341 = sand.u32 %s27, 1
        %s342 = scalar_lea.sflag [#allocation7], %s341
        %s343 = sand.u32 %s101, 1
        %s344 = smul.addr %s343, 128
        %s345 = scalar_lea.vmem [#allocation8], %s344
        // Predicated region
        $region53: #{tpu_custom_call.1} parent=43 // pred_check
          %p346 = pneg %p114
        $region54: #{tpu_custom_call.1} parent=43 // pred_check_branch
          %348 = sbr.rel (%p346) target = $region56
        $region55: #{tpu_custom_call.1} parent=43 // pred_region
          %349 = dma.done %s342, 2048
        $region56: #{tpu_custom_call.1} parent=43 // pred_fallthru
          _
        // Predicated region
        $region57: #{tpu_custom_call.1} parent=43 // pred_check
          %p350 = pneg %p135
        $region58: #{tpu_custom_call.1} parent=43 // pred_check_branch
          %352 = sbr.rel (%p350) target = $region60
        $region59: #{tpu_custom_call.1} parent=43 // pred_region
          %353 = dma.done [#allocation10], 2048
        $region60: #{tpu_custom_call.1} parent=43 // pred_fallthru
          _
        // Predicated region
        $region61: #{tpu_custom_call.1} parent=43 // pred_check
          %p354 = pneg %p156
        $region62: #{tpu_custom_call.1} parent=43 // pred_check_branch
          %356 = sbr.rel (%p354) target = $region64
        $region63: #{tpu_custom_call.1} parent=43 // pred_region
          %357 = dma.done [#allocation10], 2048
        $region64: #{tpu_custom_call.1} parent=43 // pred_fallthru
          _
        %s358 = sand.u32 %s49, 1
        %s359 = scalar_lea.sflag [#allocation4], %s358
        %s360 = sand.u32 %s49, 1
        %s361 = smul.addr %s360, 64
        %s362 = scalar_lea.vmem [#allocation3], %s361
        %p363 = pneg %p62
        %p364 = pneg %p59
        %s365 = sand.u32 %s27, 1
        %s366 = scalar_lea.sflag [#allocation7], %s365
        %s367 = sand.u32 %s75, 1
        %s368 = smul.addr %s367, 128
        %s369 = scalar_lea.vmem [#allocation6], %s368
        %p370 = pneg %p88
        %p371 = pneg %p85
        %s372 = sand.u32 %s27, 1
        %s373 = scalar_lea.sflag [#allocation7], %s372
        %s374 = sand.u32 %s101, 1
        %s375 = smul.addr %s374, 128
        %s376 = scalar_lea.vmem [#allocation8], %s375
        %p377 = pneg %p114
        %p378 = pneg %p111
        %p379 = pneg %p135
        %p380 = pneg %p132
        %p381 = pneg %p156
        %p382 = pneg %p153
        %p383 = pneg %p177
        %p384 = pneg %p174
        %p385 = pneg %p203
        %p386 = pneg %p200
        %s387 = sand.u32 %s190, 1
        %s388 = scalar_lea.sflag [#allocation5], %s387
        %s389 = sand.u32 %s190, 1
        %s390 = smul.addr %s389, 128
        %s391 = scalar_lea.vmem [#allocation12], %s390
        %s392 = smul.u32 16, %s31
        %s393 = smul.u32 16, %s32
        %s394 = smul.u32 16, %s31
        %s395 = smul.u32 16, %s31
        %p397 = scmp.eq.s32.totalorder %s32, 0
        // Predicated region
        $region65: #{tpu_custom_call.1} parent=43 // pred_check
          %p398 = pneg %p397
        $region66: #{tpu_custom_call.1} parent=43 // pred_check_branch
          %400 = sbr.rel (%p398) target = $region68
        $region67: #{tpu_custom_call.1} parent=43 // pred_region
          %401 = vst [vmem:[#allocation2] sm:$0xff] 0.0
          %402 = vst [vmem:[#allocation2 + $0x8] sm:$0xff] 0.0
          %403 = vst [vmem:[#allocation2 + $0x10] sm:$0xff] 0.0
          %404 = vst [vmem:[#allocation2 + $0x18] sm:$0xff] 0.0
          %405 = vst [vmem:[#allocation2 + $0x20] sm:$0xff] 0.0
          %406 = vst [vmem:[#allocation2 + $0x28] sm:$0xff] 0.0
          %407 = vst [vmem:[#allocation2 + $0x30] sm:$0xff] 0.0
          %408 = vst [vmem:[#allocation2 + $0x38] sm:$0xff] 0.0
          %409 = vst [vmem:[#allocation2 + $0x40] sm:$0xff] 0.0
          %410 = vst [vmem:[#allocation2 + $0x48] sm:$0xff] 0.0
          %411 = vst [vmem:[#allocation2 + $0x50] sm:$0xff] 0.0
          %412 = vst [vmem:[#allocation2 + $0x58] sm:$0xff] 0.0
          %413 = vst [vmem:[#allocation2 + $0x60] sm:$0xff] 0.0
          %414 = vst [vmem:[#allocation2 + $0x68] sm:$0xff] 0.0
          %415 = vst [vmem:[#allocation2 + $0x70] sm:$0xff] 0.0
          %416 = vst [vmem:[#allocation2 + $0x78] sm:$0xff] 0.0
        $region68: #{tpu_custom_call.1} parent=43 // pred_fallthru
          _
        %v417 = vld [vmem:[#allocation2] sm:$0xff]
        %v418 = vld [vmem:[#allocation2 + $0x8] sm:$0xff]
        %v419 = vld [vmem:[#allocation2 + $0x10] sm:$0xff]
        %v420 = vld [vmem:[#allocation2 + $0x18] sm:$0xff]
        %v421 = vld [vmem:[#allocation2 + $0x20] sm:$0xff]
        %v422 = vld [vmem:[#allocation2 + $0x28] sm:$0xff]
        %v423 = vld [vmem:[#allocation2 + $0x30] sm:$0xff]
        %v424 = vld [vmem:[#allocation2 + $0x38] sm:$0xff]
        %v425 = vld [vmem:[#allocation2 + $0x40] sm:$0xff]
        %v426 = vld [vmem:[#allocation2 + $0x48] sm:$0xff]
        %v427 = vld [vmem:[#allocation2 + $0x50] sm:$0xff]
        %v428 = vld [vmem:[#allocation2 + $0x58] sm:$0xff]
        %v429 = vld [vmem:[#allocation2 + $0x60] sm:$0xff]
        %v430 = vld [vmem:[#allocation2 + $0x68] sm:$0xff]
        %v431 = vld [vmem:[#allocation2 + $0x70] sm:$0xff]
        %v432 = vld [vmem:[#allocation2 + $0x78] sm:$0xff]
        %v433 = vld [vmem:[%s327] sm:$0xf]
        %v434 = vld [vmem:[%s327 + $0x4] sm:$0xf]
        %v435 = vld [vmem:[%s327 + $0x8] sm:$0xf]
        %v436 = vld [vmem:[%s327 + $0xc] sm:$0xf]
        %v437 = vld [vmem:[%s327 + $0x10] sm:$0xf]
        %v438 = vld [vmem:[%s327 + $0x14] sm:$0xf]
        %v439 = vld [vmem:[%s327 + $0x18] sm:$0xf]
        %v440 = vld [vmem:[%s327 + $0x1c] sm:$0xf]
        %v441 = vld [vmem:[%s327 + $0x20] sm:$0xf]
        %v442 = vld [vmem:[%s327 + $0x24] sm:$0xf]
        %v443 = vld [vmem:[%s327 + $0x28] sm:$0xf]
        %v444 = vld [vmem:[%s327 + $0x2c] sm:$0xf]
        %v445 = vld [vmem:[%s327 + $0x30] sm:$0xf]
        %v446 = vld [vmem:[%s327 + $0x34] sm:$0xf]
        %v447 = vld [vmem:[%s327 + $0x38] sm:$0xf]
        %v448 = vld [vmem:[%s327 + $0x3c] sm:$0xf]
        %v449 = vld [vmem:[%s336] sm:$0xff]
        %v450 = vld [vmem:[%s336 + $0x8] sm:$0xff]
        %v451 = vld [vmem:[%s336 + $0x10] sm:$0xff]
        %v452 = vld [vmem:[%s336 + $0x18] sm:$0xff]
        %v453 = vld [vmem:[%s336 + $0x20] sm:$0xff]
        %v454 = vld [vmem:[%s336 + $0x28] sm:$0xff]
        %v455 = vld [vmem:[%s336 + $0x30] sm:$0xff]
        %v456 = vld [vmem:[%s336 + $0x38] sm:$0xff]
        %v457 = vld [vmem:[%s336 + $0x40] sm:$0xff]
        %v458 = vld [vmem:[%s336 + $0x48] sm:$0xff]
        %v459 = vld [vmem:[%s336 + $0x50] sm:$0xff]
        %v460 = vld [vmem:[%s336 + $0x58] sm:$0xff]
        %v461 = vld [vmem:[%s336 + $0x60] sm:$0xff]
        %v462 = vld [vmem:[%s336 + $0x68] sm:$0xff]
        %v463 = vld [vmem:[%s336 + $0x70] sm:$0xff]
        %v464 = vld [vmem:[%s336 + $0x78] sm:$0xff]
        %v465 = vpack.c.bf16 %v450, %v449
        %v466 = vpack.c.bf16 %v452, %v451
        %v467 = vpack.c.bf16 %v454, %v453
        %v468 = vpack.c.bf16 %v456, %v455
        %v469 = vpack.c.bf16 %v458, %v457
        %v470 = vpack.c.bf16 %v460, %v459
        %v471 = vpack.c.bf16 %v462, %v461
        %v472 = vpack.c.bf16 %v464, %v463
        %v489 = vunpack.c.l.b16 %v433
        %v490 = vunpack.c.l.b16 %v434
        %v491 = vunpack.c.l.b16 %v435
        %v492 = vunpack.c.l.b16 %v436
        %v493 = vunpack.c.l.b16 %v437
        %v494 = vunpack.c.l.b16 %v438
        %v495 = vunpack.c.l.b16 %v439
        %v496 = vunpack.c.l.b16 %v440
        %v497 = vunpack.c.l.b16 %v441
        %v498 = vunpack.c.l.b16 %v442
        %v499 = vunpack.c.l.b16 %v443
        %v500 = vunpack.c.l.b16 %v444
        %v501 = vunpack.c.l.b16 %v445
        %v502 = vunpack.c.l.b16 %v446
        %v503 = vunpack.c.l.b16 %v447
        %v504 = vunpack.c.l.b16 %v448
        %v505 = vpack.c.b16 %v490, %v489
        %v506 = vpack.c.b16 %v492, %v491
        %v507 = vpack.c.b16 %v494, %v493
        %v508 = vpack.c.b16 %v496, %v495
        %v509 = vpack.c.b16 %v498, %v497
        %v510 = vpack.c.b16 %v500, %v499
        %v511 = vpack.c.b16 %v502, %v501
        %v512 = vpack.c.b16 %v504, %v503
        %521 = vmatprep.subr.bf16.mxu0 0
        %522 = vmatpush1.bf16.msra.mxu0 %v472
        %523 = vmatprep.subr.bf16.mxu0 0
        %524 = vmatpush1.bf16.msra.mxu0 %v471
        %525 = vmatprep.subr.bf16.mxu0 0
        %526 = vmatpush1.bf16.msra.mxu0 %v470
        %527 = vmatprep.subr.bf16.mxu0 0
        %528 = vmatpush1.bf16.msra.mxu0 %v469
        %529 = vmatprep.subr.bf16.mxu0 0
        %530 = vmatpush1.bf16.msra.mxu0 %v468
        %531 = vmatprep.subr.bf16.mxu0 0
        %532 = vmatpush1.bf16.msra.mxu0 %v467
        %533 = vmatprep.subr.bf16.mxu0 0
        %534 = vmatpush1.bf16.msra.mxu0 %v466
        %535 = vmatprep.subr.bf16.mxu0 0
        %536 = vmatpush1.bf16.msra.mxu0 %v465
        %537 = vmatprep.subr.bf16.mxu0 0
        %538 = vmatpush2.bf16.msra.mxu0 0
        %539 = vmatprep.subr.bf16.mxu0 0
        %540 = vmatpush2.bf16.msra.mxu0 0
        %541 = vmatprep.subr.bf16.mxu0 0
        %542 = vmatpush2.bf16.msra.mxu0 0
        %543 = vmatprep.subr.bf16.mxu0 0
        %544 = vmatpush2.bf16.msra.mxu0 0
        %545 = vmatprep.subr.bf16.mxu0 0
        %546 = vmatpush2.bf16.msra.mxu0 0
        %547 = vmatprep.subr.bf16.mxu0 0
        %548 = vmatpush2.bf16.msra.mxu0 0
        %549 = vmatprep.subr.bf16.mxu0 0
        %550 = vmatpush2.bf16.msra.mxu0 0
        %551 = vmatprep.subr.bf16.mxu0 0
        %552 = vmatpush2.bf16.msra.mxu0 0
        %553 = vmatprep.mubr.bf16.mxu0 0
        %554 = vmatmul.mubr.bf16.gmra.mxu0 %v505
        %v555 = vpop.f32.mrf.mxu0
        %v556 = vadd.f32 0.0, %v555
        %v557 = vpop.f32.mrf.mxu0
        %v558 = vpop.f32.mrf.mxu0
        %v559 = vadd.f32 0.0, %v558
        %v560 = vpop.f32.mrf.mxu0
        %561 = vmatprep.mubr.bf16.mxu0 0
        %562 = vmatmul.mubr.bf16.gmra.mxu0 %v506
        %v563 = vpop.f32.mrf.mxu0
        %v564 = vadd.f32 0.0, %v563
        %v565 = vpop.f32.mrf.mxu0
        %v566 = vpop.f32.mrf.mxu0
        %v567 = vadd.f32 0.0, %v566
        %v568 = vpop.f32.mrf.mxu0
        %569 = vmatprep.mubr.bf16.mxu0 0
        %570 = vmatmul.mubr.bf16.gmra.mxu0 %v507
        %v571 = vpop.f32.mrf.mxu0
        %v572 = vadd.f32 0.0, %v571
        %v573 = vpop.f32.mrf.mxu0
        %v574 = vpop.f32.mrf.mxu0
        %v575 = vadd.f32 0.0, %v574
        %v576 = vpop.f32.mrf.mxu0
        %577 = vmatprep.mubr.bf16.mxu0 0
        %578 = vmatmul.mubr.bf16.gmra.mxu0 %v508
        %v579 = vpop.f32.mrf.mxu0
        %v580 = vadd.f32 0.0, %v579
        %v581 = vpop.f32.mrf.mxu0
        %v582 = vpop.f32.mrf.mxu0
        %v583 = vadd.f32 0.0, %v582
        %v584 = vpop.f32.mrf.mxu0
        %585 = vmatprep.mubr.bf16.mxu0 0
        %586 = vmatmul.mubr.bf16.gmra.mxu0 %v509
        %v587 = vpop.f32.mrf.mxu0
        %v588 = vadd.f32 0.0, %v587
        %v589 = vpop.f32.mrf.mxu0
        %v590 = vpop.f32.mrf.mxu0
        %v591 = vadd.f32 0.0, %v590
        %v592 = vpop.f32.mrf.mxu0
        %593 = vmatprep.mubr.bf16.mxu0 0
        %594 = vmatmul.mubr.bf16.gmra.mxu0 %v510
        %v595 = vpop.f32.mrf.mxu0
        %v596 = vadd.f32 0.0, %v595
        %v597 = vpop.f32.mrf.mxu0
        %v598 = vpop.f32.mrf.mxu0
        %v599 = vadd.f32 0.0, %v598
        %v600 = vpop.f32.mrf.mxu0
        %601 = vmatprep.mubr.bf16.mxu0 0
        %602 = vmatmul.mubr.bf16.gmra.mxu0 %v511
        %v603 = vpop.f32.mrf.mxu0
        %v604 = vadd.f32 0.0, %v603
        %v605 = vpop.f32.mrf.mxu0
        %v606 = vpop.f32.mrf.mxu0
        %v607 = vadd.f32 0.0, %v606
        %v608 = vpop.f32.mrf.mxu0
        %609 = vmatprep.mubr.bf16.mxu0 0
        %610 = vmatmul.mubr.bf16.gmra.mxu0 %v512
        %v611 = vpop.f32.mrf.mxu0
        %v612 = vadd.f32 0.0, %v611
        %v613 = vpop.f32.mrf.mxu0
        %v614 = vpop.f32.mrf.mxu0
        %v615 = vadd.f32 0.0, %v614
        %v616 = vpop.f32.mrf.mxu0
        %617 = vdwg.mxu0
        %v618 = vadd.f32 %v417, %v556
        %v619 = vadd.f32 %v418, %v559
        %v620 = vadd.f32 %v419, %v564
        %v621 = vadd.f32 %v420, %v567
        %v622 = vadd.f32 %v421, %v572
        %v623 = vadd.f32 %v422, %v575
        %v624 = vadd.f32 %v423, %v580
        %v625 = vadd.f32 %v424, %v583
        %v626 = vadd.f32 %v425, %v588
        %v627 = vadd.f32 %v426, %v591
        %v628 = vadd.f32 %v427, %v596
        %v629 = vadd.f32 %v428, %v599
        %v630 = vadd.f32 %v429, %v604
        %v631 = vadd.f32 %v430, %v607
        %v632 = vadd.f32 %v431, %v612
        %v633 = vadd.f32 %v432, %v615
        %634 = vst [vmem:[#allocation2] sm:$0xff] %v618
        %635 = vst [vmem:[#allocation2 + $0x8] sm:$0xff] %v619
        %636 = vst [vmem:[#allocation2 + $0x10] sm:$0xff] %v620
        %637 = vst [vmem:[#allocation2 + $0x18] sm:$0xff] %v621
        %638 = vst [vmem:[#allocation2 + $0x20] sm:$0xff] %v622
        %639 = vst [vmem:[#allocation2 + $0x28] sm:$0xff] %v623
        %640 = vst [vmem:[#allocation2 + $0x30] sm:$0xff] %v624
        %641 = vst [vmem:[#allocation2 + $0x38] sm:$0xff] %v625
        %642 = vst [vmem:[#allocation2 + $0x40] sm:$0xff] %v626
        %643 = vst [vmem:[#allocation2 + $0x48] sm:$0xff] %v627
        %644 = vst [vmem:[#allocation2 + $0x50] sm:$0xff] %v628
        %645 = vst [vmem:[#allocation2 + $0x58] sm:$0xff] %v629
        %646 = vst [vmem:[#allocation2 + $0x60] sm:$0xff] %v630
        %647 = vst [vmem:[#allocation2 + $0x68] sm:$0xff] %v631
        %648 = vst [vmem:[#allocation2 + $0x70] sm:$0xff] %v632
        %649 = vst [vmem:[#allocation2 + $0x78] sm:$0xff] %v633
        %p650 = scmp.eq.s32.totalorder %s32, 1
        // Predicated region
        $region69: #{tpu_custom_call.1} parent=43 // pred_check
          %p651 = pneg %p650
        $region70: #{tpu_custom_call.1} parent=43 // pred_check_branch
          %653 = sbr.rel (%p651) target = $region72
        $region71: #{tpu_custom_call.1} parent=43 // pred_region
          %v654 = vld [vmem:[%s345] sm:$0xff]
          %v655 = vld [vmem:[%s345 + $0x8] sm:$0xff]
          %v656 = vld [vmem:[%s345 + $0x10] sm:$0xff]
          %v657 = vld [vmem:[%s345 + $0x18] sm:$0xff]
          %v658 = vld [vmem:[%s345 + $0x20] sm:$0xff]
          %v659 = vld [vmem:[%s345 + $0x28] sm:$0xff]
          %v660 = vld [vmem:[%s345 + $0x30] sm:$0xff]
          %v661 = vld [vmem:[%s345 + $0x38] sm:$0xff]
          %v662 = vld [vmem:[%s345 + $0x40] sm:$0xff]
          %v663 = vld [vmem:[%s345 + $0x48] sm:$0xff]
          %v664 = vld [vmem:[%s345 + $0x50] sm:$0xff]
          %v665 = vld [vmem:[%s345 + $0x58] sm:$0xff]
          %v666 = vld [vmem:[%s345 + $0x60] sm:$0xff]
          %v667 = vld [vmem:[%s345 + $0x68] sm:$0xff]
          %v668 = vld [vmem:[%s345 + $0x70] sm:$0xff]
          %v669 = vld [vmem:[%s345 + $0x78] sm:$0xff]
          %v670 = vld [vmem:[#allocation9] sm:$0xff]
          %v671 = vld [vmem:[#allocation9 + $0x8] sm:$0xff]
          %v672 = vld [vmem:[#allocation9 + $0x10] sm:$0xff]
          %v673 = vld [vmem:[#allocation9 + $0x18] sm:$0xff]
          %v674 = vld [vmem:[#allocation9 + $0x20] sm:$0xff]
          %v675 = vld [vmem:[#allocation9 + $0x28] sm:$0xff]
          %v676 = vld [vmem:[#allocation9 + $0x30] sm:$0xff]
          %v677 = vld [vmem:[#allocation9 + $0x38] sm:$0xff]
          %v678 = vld [vmem:[#allocation9 + $0x40] sm:$0xff]
          %v679 = vld [vmem:[#allocation9 + $0x48] sm:$0xff]
          %v680 = vld [vmem:[#allocation9 + $0x50] sm:$0xff]
          %v681 = vld [vmem:[#allocation9 + $0x58] sm:$0xff]
          %v682 = vld [vmem:[#allocation9 + $0x60] sm:$0xff]
          %v683 = vld [vmem:[#allocation9 + $0x68] sm:$0xff]
          %v684 = vld [vmem:[#allocation9 + $0x70] sm:$0xff]
          %v685 = vld [vmem:[#allocation9 + $0x78] sm:$0xff]
          %v686 = vld [vmem:[#allocation2] sm:$0xff]
          %v687 = vld [vmem:[#allocation2 + $0x8] sm:$0xff]
          %v688 = vld [vmem:[#allocation2 + $0x10] sm:$0xff]
          %v689 = vld [vmem:[#allocation2 + $0x18] sm:$0xff]
          %v690 = vld [vmem:[#allocation2 + $0x20] sm:$0xff]
          %v691 = vld [vmem:[#allocation2 + $0x28] sm:$0xff]
          %v692 = vld [vmem:[#allocation2 + $0x30] sm:$0xff]
          %v693 = vld [vmem:[#allocation2 + $0x38] sm:$0xff]
          %v694 = vld [vmem:[#allocation2 + $0x40] sm:$0xff]
          %v695 = vld [vmem:[#allocation2 + $0x48] sm:$0xff]
          %v696 = vld [vmem:[#allocation2 + $0x50] sm:$0xff]
          %v697 = vld [vmem:[#allocation2 + $0x58] sm:$0xff]
          %v698 = vld [vmem:[#allocation2 + $0x60] sm:$0xff]
          %v699 = vld [vmem:[#allocation2 + $0x68] sm:$0xff]
          %v700 = vld [vmem:[#allocation2 + $0x70] sm:$0xff]
          %v701 = vld [vmem:[#allocation2 + $0x78] sm:$0xff]
          %v702 = vld [vmem:[#allocation11] sm:$0xff]
          %v703 = vld [vmem:[#allocation11 + $0x8] sm:$0xff]
          %v704 = vld [vmem:[#allocation11 + $0x10] sm:$0xff]
          %v705 = vld [vmem:[#allocation11 + $0x18] sm:$0xff]
          %v706 = vld [vmem:[#allocation11 + $0x20] sm:$0xff]
          %v707 = vld [vmem:[#allocation11 + $0x28] sm:$0xff]
          %v708 = vld [vmem:[#allocation11 + $0x30] sm:$0xff]
          %v709 = vld [vmem:[#allocation11 + $0x38] sm:$0xff]
          %v710 = vld [vmem:[#allocation11 + $0x40] sm:$0xff]
          %v711 = vld [vmem:[#allocation11 + $0x48] sm:$0xff]
          %v712 = vld [vmem:[#allocation11 + $0x50] sm:$0xff]
          %v713 = vld [vmem:[#allocation11 + $0x58] sm:$0xff]
          %v714 = vld [vmem:[#allocation11 + $0x60] sm:$0xff]
          %v715 = vld [vmem:[#allocation11 + $0x68] sm:$0xff]
          %v716 = vld [vmem:[#allocation11 + $0x70] sm:$0xff]
          %v717 = vld [vmem:[#allocation11 + $0x78] sm:$0xff]
          %718 = vmatprep.subr.mxu0 0.0
          %719 = vmatpush1.msra.mxu0 %v717
          %720 = vmatprep.subr.mxu0 0.0
          %721 = vmatpush1.msra.mxu0 %v716
          %722 = vmatprep.subr.mxu0 0.0
          %723 = vmatpush1.msra.mxu0 %v715
          %724 = vmatprep.subr.mxu0 0.0
          %725 = vmatpush1.msra.mxu0 %v714
          %726 = vmatprep.subr.mxu0 0.0
          %727 = vmatpush1.msra.mxu0 %v713
          %728 = vmatprep.subr.mxu0 0.0
          %729 = vmatpush1.msra.mxu0 %v712
          %730 = vmatprep.subr.mxu0 0.0
          %731 = vmatpush1.msra.mxu0 %v711
          %732 = vmatprep.subr.mxu0 0.0
          %733 = vmatpush1.msra.mxu0 %v710
          %734 = vmatprep.subr.mxu0 0.0
          %735 = vmatpush1.msra.mxu0 %v709
          %736 = vmatprep.subr.mxu0 0.0
          %737 = vmatpush1.msra.mxu0 %v708
          %738 = vmatprep.subr.mxu0 0.0
          %739 = vmatpush1.msra.mxu0 %v707
          %740 = vmatprep.subr.mxu0 0.0
          %741 = vmatpush1.msra.mxu0 %v706
          %742 = vmatprep.subr.mxu0 0.0
          %743 = vmatpush1.msra.mxu0 %v705
          %744 = vmatprep.subr.mxu0 0.0
          %745 = vmatpush1.msra.mxu0 %v704
          %746 = vmatprep.subr.mxu0 0.0
          %747 = vmatpush1.msra.mxu0 %v703
          %748 = vmatprep.subr.mxu0 0.0
          %749 = vmatpush1.msra.mxu0 %v702
          %750 = vmatprep.subr.mxu0 0.0
          %751 = vmatpush2.msra.mxu0 0.0
          %752 = vmatprep.subr.mxu0 0.0
          %753 = vmatpush2.msra.mxu0 0.0
          %754 = vmatprep.subr.mxu0 0.0
          %755 = vmatpush2.msra.mxu0 0.0
          %756 = vmatprep.subr.mxu0 0.0
          %757 = vmatpush2.msra.mxu0 0.0
          %758 = vmatprep.subr.mxu0 0.0
          %759 = vmatpush2.msra.mxu0 0.0
          %760 = vmatprep.subr.mxu0 0.0
          %761 = vmatpush2.msra.mxu0 0.0
          %762 = vmatprep.subr.mxu0 0.0
          %763 = vmatpush2.msra.mxu0 0.0
          %764 = vmatprep.subr.mxu0 0.0
          %765 = vmatpush2.msra.mxu0 0.0
          %766 = vmatprep.subr.mxu0 0.0
          %767 = vmatpush2.msra.mxu0 0.0
          %768 = vmatprep.subr.mxu0 0.0
          %769 = vmatpush2.msra.mxu0 0.0
          %770 = vmatprep.subr.mxu0 0.0
          %771 = vmatpush2.msra.mxu0 0.0
          %772 = vmatprep.subr.mxu0 0.0
          %773 = vmatpush2.msra.mxu0 0.0
          %774 = vmatprep.subr.mxu0 0.0
          %775 = vmatpush2.msra.mxu0 0.0
          %776 = vmatprep.subr.mxu0 0.0
          %777 = vmatpush2.msra.mxu0 0.0
          %778 = vmatprep.subr.mxu0 0.0
          %779 = vmatpush2.msra.mxu0 0.0
          %780 = vmatprep.subr.mxu0 0.0
          %781 = vmatpush2.msra.mxu0 0.0
          %782 = vmatprep.mubr.f32.mxu0 0.0
          %783 = vmatmul.mubr.f32.gmra.mxu0 %v686
          %v784 = vpop.f32.mrf.mxu0
          %v785 = vadd.f32 0.0, %v784
          %v786 = vpop.f32.mrf.mxu0
          %787 = vmatprep.mubr.f32.mxu0 0.0
          %788 = vmatmul.mubr.f32.gmra.mxu0 %v687
          %v789 = vpop.f32.mrf.mxu0
          %v790 = vadd.f32 0.0, %v789
          %v791 = vpop.f32.mrf.mxu0
          %792 = vmatprep.mubr.f32.mxu0 0.0
          %793 = vmatmul.mubr.f32.gmra.mxu0 %v688
          %v794 = vpop.f32.mrf.mxu0
          %v795 = vadd.f32 0.0, %v794
          %v796 = vpop.f32.mrf.mxu0
          %797 = vmatprep.mubr.f32.mxu0 0.0
          %798 = vmatmul.mubr.f32.gmra.mxu0 %v689
          %v799 = vpop.f32.mrf.mxu0
          %v800 = vadd.f32 0.0, %v799
          %v801 = vpop.f32.mrf.mxu0
          %802 = vmatprep.mubr.f32.mxu0 0.0
          %803 = vmatmul.mubr.f32.gmra.mxu0 %v690
          %v804 = vpop.f32.mrf.mxu0
          %v805 = vadd.f32 0.0, %v804
          %v806 = vpop.f32.mrf.mxu0
          %807 = vmatprep.mubr.f32.mxu0 0.0
          %808 = vmatmul.mubr.f32.gmra.mxu0 %v691
          %v809 = vpop.f32.mrf.mxu0
          %v810 = vadd.f32 0.0, %v809
          %v811 = vpop.f32.mrf.mxu0
          %812 = vmatprep.mubr.f32.mxu0 0.0
          %813 = vmatmul.mubr.f32.gmra.mxu0 %v692
          %v814 = vpop.f32.mrf.mxu0
          %v815 = vadd.f32 0.0, %v814
          %v816 = vpop.f32.mrf.mxu0
          %817 = vmatprep.mubr.f32.mxu0 0.0
          %818 = vmatmul.mubr.f32.gmra.mxu0 %v693
          %v819 = vpop.f32.mrf.mxu0
          %v820 = vadd.f32 0.0, %v819
          %v821 = vpop.f32.mrf.mxu0
          %822 = vmatprep.mubr.f32.mxu0 0.0
          %823 = vmatmul.mubr.f32.gmra.mxu0 %v694
          %v824 = vpop.f32.mrf.mxu0
          %v825 = vadd.f32 0.0, %v824
          %v826 = vpop.f32.mrf.mxu0
          %827 = vmatprep.mubr.f32.mxu0 0.0
          %828 = vmatmul.mubr.f32.gmra.mxu0 %v695
          %v829 = vpop.f32.mrf.mxu0
          %v830 = vadd.f32 0.0, %v829
          %v831 = vpop.f32.mrf.mxu0
          %832 = vmatprep.mubr.f32.mxu0 0.0
          %833 = vmatmul.mubr.f32.gmra.mxu0 %v696
          %v834 = vpop.f32.mrf.mxu0
          %v835 = vadd.f32 0.0, %v834
          %v836 = vpop.f32.mrf.mxu0
          %837 = vmatprep.mubr.f32.mxu0 0.0
          %838 = vmatmul.mubr.f32.gmra.mxu0 %v697
          %v839 = vpop.f32.mrf.mxu0
          %v840 = vadd.f32 0.0, %v839
          %v841 = vpop.f32.mrf.mxu0
          %842 = vmatprep.mubr.f32.mxu0 0.0
          %843 = vmatmul.mubr.f32.gmra.mxu0 %v698
          %v844 = vpop.f32.mrf.mxu0
          %v845 = vadd.f32 0.0, %v844
          %v846 = vpop.f32.mrf.mxu0
          %847 = vmatprep.mubr.f32.mxu0 0.0
          %848 = vmatmul.mubr.f32.gmra.mxu0 %v699
          %v849 = vpop.f32.mrf.mxu0
          %v850 = vadd.f32 0.0, %v849
          %v851 = vpop.f32.mrf.mxu0
          %852 = vmatprep.mubr.f32.mxu0 0.0
          %853 = vmatmul.mubr.f32.gmra.mxu0 %v700
          %v854 = vpop.f32.mrf.mxu0
          %v855 = vadd.f32 0.0, %v854
          %v856 = vpop.f32.mrf.mxu0
          %857 = vmatprep.mubr.f32.mxu0 0.0
          %858 = vmatmul.mubr.f32.gmra.mxu0 %v701
          %v859 = vpop.f32.mrf.mxu0
          %v860 = vadd.f32 0.0, %v859
          %v861 = vpop.f32.mrf.mxu0
          %862 = vdwg.mxu0
          %863 = vmatprep.subr.mxu0 0.0
          %864 = vmatpush1.msra.mxu0 %v685
          %865 = vmatprep.subr.mxu0 0.0
          %866 = vmatpush1.msra.mxu0 %v684
          %867 = vmatprep.subr.mxu0 0.0
          %868 = vmatpush1.msra.mxu0 %v683
          %869 = vmatprep.subr.mxu0 0.0
          %870 = vmatpush1.msra.mxu0 %v682
          %871 = vmatprep.subr.mxu0 0.0
          %872 = vmatpush1.msra.mxu0 %v681
          %873 = vmatprep.subr.mxu0 0.0
          %874 = vmatpush1.msra.mxu0 %v680
          %875 = vmatprep.subr.mxu0 0.0
          %876 = vmatpush1.msra.mxu0 %v679
          %877 = vmatprep.subr.mxu0 0.0
          %878 = vmatpush1.msra.mxu0 %v678
          %879 = vmatprep.subr.mxu0 0.0
          %880 = vmatpush1.msra.mxu0 %v677
          %881 = vmatprep.subr.mxu0 0.0
          %882 = vmatpush1.msra.mxu0 %v676
          %883 = vmatprep.subr.mxu0 0.0
          %884 = vmatpush1.msra.mxu0 %v675
          %885 = vmatprep.subr.mxu0 0.0
          %886 = vmatpush1.msra.mxu0 %v674
          %887 = vmatprep.subr.mxu0 0.0
          %888 = vmatpush1.msra.mxu0 %v673
          %889 = vmatprep.subr.mxu0 0.0
          %890 = vmatpush1.msra.mxu0 %v672
          %891 = vmatprep.subr.mxu0 0.0
          %892 = vmatpush1.msra.mxu0 %v671
          %893 = vmatprep.subr.mxu0 0.0
          %894 = vmatpush1.msra.mxu0 %v670
          %895 = vmatprep.subr.mxu0 0.0
          %896 = vmatpush2.msra.mxu0 0.0
          %897 = vmatprep.subr.mxu0 0.0
          %898 = vmatpush2.msra.mxu0 0.0
          %899 = vmatprep.subr.mxu0 0.0
          %900 = vmatpush2.msra.mxu0 0.0
          %901 = vmatprep.subr.mxu0 0.0
          %902 = vmatpush2.msra.mxu0 0.0
          %903 = vmatprep.subr.mxu0 0.0
          %904 = vmatpush2.msra.mxu0 0.0
          %905 = vmatprep.subr.mxu0 0.0
          %906 = vmatpush2.msra.mxu0 0.0
          %907 = vmatprep.subr.mxu0 0.0
          %908 = vmatpush2.msra.mxu0 0.0
          %909 = vmatprep.subr.mxu0 0.0
          %910 = vmatpush2.msra.mxu0 0.0
          %911 = vmatprep.subr.mxu0 0.0
          %912 = vmatpush2.msra.mxu0 0.0
          %913 = vmatprep.subr.mxu0 0.0
          %914 = vmatpush2.msra.mxu0 0.0
          %915 = vmatprep.subr.mxu0 0.0
          %916 = vmatpush2.msra.mxu0 0.0
          %917 = vmatprep.subr.mxu0 0.0
          %918 = vmatpush2.msra.mxu0 0.0
          %919 = vmatprep.subr.mxu0 0.0
          %920 = vmatpush2.msra.mxu0 0.0
          %921 = vmatprep.subr.mxu0 0.0
          %922 = vmatpush2.msra.mxu0 0.0
          %923 = vmatprep.subr.mxu0 0.0
          %924 = vmatpush2.msra.mxu0 0.0
          %925 = vmatprep.subr.mxu0 0.0
          %926 = vmatpush2.msra.mxu0 0.0
          %927 = vmatprep.mubr.f32.mxu0 0.0
          %928 = vmatmul.mubr.f32.gmra.mxu0 %v654
          %v929 = vpop.f32.mrf.mxu0
          %v930 = vadd.f32 %v785, %v929
          %v931 = vpop.f32.mrf.mxu0
          %932 = vmatprep.mubr.f32.mxu0 0.0
          %933 = vmatmul.mubr.f32.gmra.mxu0 %v655
          %v934 = vpop.f32.mrf.mxu0
          %v935 = vadd.f32 %v790, %v934
          %v936 = vpop.f32.mrf.mxu0
          %937 = vmatprep.mubr.f32.mxu0 0.0
          %938 = vmatmul.mubr.f32.gmra.mxu0 %v656
          %v939 = vpop.f32.mrf.mxu0
          %v940 = vadd.f32 %v795, %v939
          %v941 = vpop.f32.mrf.mxu0
          %942 = vmatprep.mubr.f32.mxu0 0.0
          %943 = vmatmul.mubr.f32.gmra.mxu0 %v657
          %v944 = vpop.f32.mrf.mxu0
          %v945 = vadd.f32 %v800, %v944
          %v946 = vpop.f32.mrf.mxu0
          %947 = vmatprep.mubr.f32.mxu0 0.0
          %948 = vmatmul.mubr.f32.gmra.mxu0 %v658
          %v949 = vpop.f32.mrf.mxu0
          %v950 = vadd.f32 %v805, %v949
          %v951 = vpop.f32.mrf.mxu0
          %952 = vmatprep.mubr.f32.mxu0 0.0
          %953 = vmatmul.mubr.f32.gmra.mxu0 %v659
          %v954 = vpop.f32.mrf.mxu0
          %v955 = vadd.f32 %v810, %v954
          %v956 = vpop.f32.mrf.mxu0
          %957 = vmatprep.mubr.f32.mxu0 0.0
          %958 = vmatmul.mubr.f32.gmra.mxu0 %v660
          %v959 = vpop.f32.mrf.mxu0
          %v960 = vadd.f32 %v815, %v959
          %v961 = vpop.f32.mrf.mxu0
          %962 = vmatprep.mubr.f32.mxu0 0.0
          %963 = vmatmul.mubr.f32.gmra.mxu0 %v661
          %v964 = vpop.f32.mrf.mxu0
          %v965 = vadd.f32 %v820, %v964
          %v966 = vpop.f32.mrf.mxu0
          %967 = vmatprep.mubr.f32.mxu0 0.0
          %968 = vmatmul.mubr.f32.gmra.mxu0 %v662
          %v969 = vpop.f32.mrf.mxu0
          %v970 = vadd.f32 %v825, %v969
          %v971 = vpop.f32.mrf.mxu0
          %972 = vmatprep.mubr.f32.mxu0 0.0
          %973 = vmatmul.mubr.f32.gmra.mxu0 %v663
          %v974 = vpop.f32.mrf.mxu0
          %v975 = vadd.f32 %v830, %v974
          %v976 = vpop.f32.mrf.mxu0
          %977 = vmatprep.mubr.f32.mxu0 0.0
          %978 = vmatmul.mubr.f32.gmra.mxu0 %v664
          %v979 = vpop.f32.mrf.mxu0
          %v980 = vadd.f32 %v835, %v979
          %v981 = vpop.f32.mrf.mxu0
          %982 = vmatprep.mubr.f32.mxu0 0.0
          %983 = vmatmul.mubr.f32.gmra.mxu0 %v665
          %v984 = vpop.f32.mrf.mxu0
          %v985 = vadd.f32 %v840, %v984
          %v986 = vpop.f32.mrf.mxu0
          %987 = vmatprep.mubr.f32.mxu0 0.0
          %988 = vmatmul.mubr.f32.gmra.mxu0 %v666
          %v989 = vpop.f32.mrf.mxu0
          %v990 = vadd.f32 %v845, %v989
          %v991 = vpop.f32.mrf.mxu0
          %992 = vmatprep.mubr.f32.mxu0 0.0
          %993 = vmatmul.mubr.f32.gmra.mxu0 %v667
          %v994 = vpop.f32.mrf.mxu0
          %v995 = vadd.f32 %v850, %v994
          %v996 = vpop.f32.mrf.mxu0
          %997 = vmatprep.mubr.f32.mxu0 0.0
          %998 = vmatmul.mubr.f32.gmra.mxu0 %v668
          %v999 = vpop.f32.mrf.mxu0
          %v1000 = vadd.f32 %v855, %v999
          %v1001 = vpop.f32.mrf.mxu0
          %1002 = vmatprep.mubr.f32.mxu0 0.0
          %1003 = vmatmul.mubr.f32.gmra.mxu0 %v669
          %v1004 = vpop.f32.mrf.mxu0
          %v1005 = vadd.f32 %v860, %v1004
          %v1006 = vpop.f32.mrf.mxu0
          %1007 = vdwg.mxu0
          %v1008 = vld [vmem:[%s5] sm:$0x1]
          %v1010 = vlaneseq
          %v1011 = vshrl.u32 %v1010, 7
          %v1012 = vsub.s32 0, %v1011
          %v1013 = vrot.slane %v1008, %v1012
          %v1015 = vadd.f32 %v930, %v1013
          %v1016 = vadd.f32 %v935, %v1013
          %v1017 = vadd.f32 %v940, %v1013
          %v1018 = vadd.f32 %v945, %v1013
          %v1019 = vadd.f32 %v950, %v1013
          %v1020 = vadd.f32 %v955, %v1013
          %v1021 = vadd.f32 %v960, %v1013
          %v1022 = vadd.f32 %v965, %v1013
          %v1023 = vadd.f32 %v970, %v1013
          %v1024 = vadd.f32 %v975, %v1013
          %v1025 = vadd.f32 %v980, %v1013
          %v1026 = vadd.f32 %v985, %v1013
          %v1027 = vadd.f32 %v990, %v1013
          %v1028 = vadd.f32 %v995, %v1013
          %v1029 = vadd.f32 %v1000, %v1013
          %v1030 = vadd.f32 %v1005, %v1013
          %v1031 = vmax.f32 %v1015, 0.0
          %v1032 = vmax.f32 %v1016, 0.0
          %v1033 = vmax.f32 %v1017, 0.0
          %v1034 = vmax.f32 %v1018, 0.0
          %v1035 = vmax.f32 %v1019, 0.0
          %v1036 = vmax.f32 %v1020, 0.0
          %v1037 = vmax.f32 %v1021, 0.0
          %v1038 = vmax.f32 %v1022, 0.0
          %v1039 = vmax.f32 %v1023, 0.0
          %v1040 = vmax.f32 %v1024, 0.0
          %v1041 = vmax.f32 %v1025, 0.0
          %v1042 = vmax.f32 %v1026, 0.0
          %v1043 = vmax.f32 %v1027, 0.0
          %v1044 = vmax.f32 %v1028, 0.0
          %v1045 = vmax.f32 %v1029, 0.0
          %v1046 = vmax.f32 %v1030, 0.0
          %1047 = vst [vmem:[%s391] sm:$0xff] %v1031
          %1048 = vst [vmem:[%s391 + $0x8] sm:$0xff] %v1032
          %1049 = vst [vmem:[%s391 + $0x10] sm:$0xff] %v1033
          %1050 = vst [vmem:[%s391 + $0x18] sm:$0xff] %v1034
          %1051 = vst [vmem:[%s391 + $0x20] sm:$0xff] %v1035
          %1052 = vst [vmem:[%s391 + $0x28] sm:$0xff] %v1036
          %1053 = vst [vmem:[%s391 + $0x30] sm:$0xff] %v1037
          %1054 = vst [vmem:[%s391 + $0x38] sm:$0xff] %v1038
          %1055 = vst [vmem:[%s391 + $0x40] sm:$0xff] %v1039
          %1056 = vst [vmem:[%s391 + $0x48] sm:$0xff] %v1040
          %1057 = vst [vmem:[%s391 + $0x50] sm:$0xff] %v1041
          %1058 = vst [vmem:[%s391 + $0x58] sm:$0xff] %v1042
          %1059 = vst [vmem:[%s391 + $0x60] sm:$0xff] %v1043
          %1060 = vst [vmem:[%s391 + $0x68] sm:$0xff] %v1044
          %1061 = vst [vmem:[%s391 + $0x70] sm:$0xff] %v1045
          %1062 = vst [vmem:[%s391 + $0x78] sm:$0xff] %v1046
        $region72: #{tpu_custom_call.1} parent=43 // pred_fallthru
          _
        %s1063 = sand.u32 %s190, 1
        %s1064 = scalar_lea.sflag [#allocation5], %s1063
        %s1065 = sand.u32 %s190, 1
        %s1066 = smul.addr %s1065, 128
        %s1067 = scalar_lea.vmem [#allocation12], %s1066
        // Predicated region
        $region73: #{tpu_custom_call.1} parent=43 // pred_check
          %p1068 = pneg %p200
        $region74: #{tpu_custom_call.1} parent=43 // pred_check_branch
          %1070 = sbr.rel (%p1068) target = $region76
        $region75: #{tpu_custom_call.1} parent=43 // pred_region
          %s1071 = smul.u32 16, %s31
          %s1073 = ssub.s32 2048, 2048
          %1074 = vsyncadd %s1064, %s1073
          %s1075 = smul.addr %s1071, 128
          %s1076 = scalar_lea.hbm %s6, %s1075
          %s1077 = sshll.u32 %s1067, 4
          %s1078 = int_to_ptr.vmem [resolvable:$true] %s1077
          %1083 = dma.vmem_to_hbm [thread:$0]  %s1078, 2048, %s1076, %s1064, 128, 128, 8
        $region76: #{tpu_custom_call.1} parent=43 // pred_fallthru
          _
      $region44: #{tpu_custom_call.1} parent=5 // pred_fallthru
        _
      %p1084 = scmp.le.s32.totalorder 2, %s22
      // Predicated region
      $region77: #{tpu_custom_call.1} parent=5 // pred_check
        %p1085 = pneg %p1084
      $region78: #{tpu_custom_call.1} parent=5 // pred_check_branch
        %1087 = sbr.rel (%p1085) target = $region80
      $region79: #{tpu_custom_call.1} parent=5 // pred_region
        %s1088 = ssub.s32 %s22, 2
        // Predicated region
        $region81: #{tpu_custom_call.1} parent=79 // pred_check
          %p1089 = pneg %p206
        $region82: #{tpu_custom_call.1} parent=79 // pred_check_branch
          %1091 = sbr.rel (%p1089) target = $region84
        $region83: #{tpu_custom_call.1} parent=79 // pred_region
          %s1092 = sand.u32 %s191, 1
          %s1093 = scalar_lea.sflag [#allocation5], %s1092
          %s1094 = sand.u32 %s191, 1
          %s1095 = smul.addr %s1094, 128
          %s1096 = scalar_lea.vmem [#allocation12], %s1095
          %1097 = dma.done %s1093, 2048
        $region84: #{tpu_custom_call.1} parent=79 // pred_fallthru
          _
      $region80: #{tpu_custom_call.1} parent=5 // pred_fallthru
        _
    $region6: #{tpu_custom_call.1} parent=1 // loop_footer
      %s26 = sadd.s32 1, %s22
    $region7: #{tpu_custom_call.1} parent=1 // loop_footer_branch
      %21 = sbr.rel target = $region3
    $region8: #{tpu_custom_call.1} parent=1 // loop_exit
      _
    %1098 = vsyncpa [#allocation4], 1
    %s1099 = scalar_lea.sflag [#allocation4], 1
    %1100 = vsyncpa %s1099, 1
    %1101 = vsyncpa [#allocation7], 1
    %s1102 = scalar_lea.sflag [#allocation7], 1
    %1103 = vsyncpa %s1102, 1
    %1104 = vsyncpa [#allocation10], 1
    %1105 = vsyncpa [#allocation5], 1
    %s1106 = scalar_lea.sflag [#allocation5], 1
    %1107 = vsyncpa %s1106, 1

</llo_original>
